<compile_context>
chip_gen: v7x
topology: tpu7x:2x2x1
jax: 0.10.0
libtpu: 0.0.40
codegen_flags: <defaults>
</compile_context>

<pallas_src>
import functools

import jax
import jax.numpy as jnp
from jax.experimental import pallas as pl
from jax.experimental.pallas import tpu as pltpu


def dsam_kernel(x_ref, col_ref,
                wdr_ref, bdr_ref,
                wfc_ref, bfc_ref,
                wcat_ref, bcat_ref,
                wc1_ref, wc2_ref,
                w4_ref, b4_ref,
                o_ref):
    x = x_ref[0].astype(jnp.float32)      # (C, HW)  f32 for VPU work
    cols = col_ref[0]                     # (9, HW)  im2col of the depth map

    # ---- depth_revise: Conv2d(1,16,3,p=1) + folded BN + ReLU ----
    d = jnp.dot(wdr_ref[...], cols, preferred_element_type=jnp.float32)
    d = jnp.maximum(d + bdr_ref[...], 0.0)                 # (16, HW)

    # ---- fc: Conv2d(16,3,1) -> gate logits ----
    gate = jnp.dot(wfc_ref[...], d, preferred_element_type=jnp.float32)
    gate = gate + bfc_ref[...]                              # (3, HW)

    # ---- GumbelSoftmax2D(hard=True), gumbel=False: argmax one-hot ----
    g0 = gate[0:1, :]
    g1 = gate[1:2, :]
    g2 = gate[2:3, :]
    oh0 = jnp.logical_and(g0 >= g1, g0 >= g2)
    oh1 = jnp.logical_and(jnp.logical_not(oh0), g1 >= g2)
    oh2 = jnp.logical_and(jnp.logical_not(oh0), jnp.logical_not(oh1))

    # mean over the 16 depth_revise channels, applied to x ONCE
    dmean = jnp.mean(d, axis=0, keepdims=True)              # (1, HW)
    xg = x * dmean                                          # (C, HW)
    zeros = jnp.zeros_like(xg)

    # ---- three gated 1x1 convs fused into one K=3C matmul + residual ----
    s_cat = jnp.concatenate(
        [jnp.where(oh0, xg, zeros),
         jnp.where(oh1, xg, zeros),
         jnp.where(oh2, xg, zeros)], axis=0).astype(jnp.bfloat16)  # (3C, HW)
    xs = jnp.dot(wcat_ref[...], s_cat, preferred_element_type=jnp.float32)
    xs = xs + bcat_ref[...] + x                             # (C, HW)

    # ---- ChannelAttentionLayer: GAP -> 1x1 -> ReLU -> 1x1 -> sigmoid (f32) ----
    y = jnp.mean(xs, axis=1, keepdims=True)                 # (C, 1)
    y = jnp.maximum(
        jnp.dot(wc1_ref[...], y, preferred_element_type=jnp.float32), 0.0)
    y = jax.nn.sigmoid(
        jnp.dot(wc2_ref[...], y, preferred_element_type=jnp.float32))  # (C, 1)
    xs = xs * y

    # ---- conv4: Conv2d(C,4,1), lane-dense (4, HW) output ----
    o = jnp.dot(w4_ref[...], xs.astype(jnp.bfloat16),
                preferred_element_type=jnp.float32) + b4_ref[...]
    o_ref[0] = o.astype(o_ref.dtype)


def adaptive_dsam_forward(x_nchw, bins_nchw, fused):
    """x_nchw: (N, C, H, W) f32, bins_nchw: (N, 1, H, W) f32."""
    N, C, H, W = x_nchw.shape
    HW = H * W

    # channels-first flatten: free reshape, no HBM transpose; bf16 halves
    # HBM->VMEM traffic for x (matmul operands are bf16, accumulate in f32).
    x_flat = x_nchw.reshape(N, C, HW).astype(jnp.bfloat16)

    # im2col of the 1-channel depth map, stored LANE-DENSE as (N, 9, HW).
    b = bins_nchw[:, 0]                                     # (N, H, W)
    bp = jnp.pad(b, ((0, 0), (1, 1), (1, 1)))               # zero-pad, padding=1
    cols = jnp.stack(
        [bp[:, dh:dh + H, dw:dw + W] for dh in range(3) for dw in range(3)],
        axis=1).reshape(N, 9, HW)

    ins = [
        x_flat, cols,
        fused["w_dr"], fused["b_dr"],
        fused["w_fc"], fused["b_fc"],
        fused["w_cat"], fused["b_cat"],
        fused["w_ca1"], fused["w_ca2"],
        fused["w4"], fused["b4"],
    ]

    def wspec(a):
        return pl.BlockSpec(a.shape, lambda n: (0, 0))

    in_specs = [
        pl.BlockSpec((1, C, HW), lambda n: (n, 0, 0)),
        pl.BlockSpec((1, 9, HW), lambda n: (n, 0, 0)),
    ] + [wspec(a) for a in ins[2:]]

    out_flat = pl.pallas_call(
        dsam_kernel,
        out_shape=jax.ShapeDtypeStruct((N, 4, HW), jnp.float32),
        grid_spec=pltpu.PrefetchScalarGridSpec(
            num_scalar_prefetch=0,
            grid=(N,),
            in_specs=in_specs,
            out_specs=pl.BlockSpec((1, 4, HW), lambda n: (n, 0, 0)),
        ),
        compiler_params=pltpu.CompilerParams(
            dimension_semantics=("parallel",),
            vmem_limit_bytes=32 * 1024 * 1024),
    )(*ins)

    # already (N, 4, HW) = NCHW order flattened -> free reshape, no transpose.
    return out_flat.reshape(N, 4, H, W)


def init_params(key, channel, reduction=16):
    """Raw (PyTorch-equivalent) parameters, matmul-oriented (Cout, Cin)."""
    cmid = max(1, channel // reduction)
    ks = list(jax.random.split(key, 18))

    def rnd(k, shape, scale=0.1):
        return jax.random.normal(k, shape, dtype=jnp.float32) * scale

    return {
        # depth_revise conv: torch (16,1,3,3) -> (16, 9)
        "w_dr": rnd(ks[0], (16, 9)), "b_dr": rnd(ks[1], (16, 1)),
        "gamma": 1.0 + rnd(ks[2], (16,)), "beta": rnd(ks[3], (16,)),
        "r_mean": rnd(ks[4], (16,)), "r_var": jnp.abs(rnd(ks[5], (16,))) + 1.0,
        # fc: Conv2d(16,3,1)
        "w_fc": rnd(ks[6], (3, 16)), "b_fc": rnd(ks[7], (3, 1)),
        # conv0/1/2: Conv2d(C,C,1)
        "w0": rnd(ks[8], (channel, channel)), "b0": rnd(ks[9], (channel, 1)),
        "w1": rnd(ks[10], (channel, channel)), "b1": rnd(ks[11], (channel, 1)),
        "w2": rnd(ks[12], (channel, channel)), "b2": rnd(ks[13], (channel, 1)),
        # ChannelAttentionLayer convs (bias=False)
        "w_ca1": rnd(ks[14], (cmid, channel)),
        "w_ca2": rnd(ks[15], (channel, cmid)),
        # conv4: Conv2d(C,4,1)
        "w4": rnd(ks[16], (4, channel)), "b4": rnd(ks[17], (4, 1)),
    }


def fuse_params(p):
    """Host-side folding: BN+bias into depth_revise, conv0/1/2 -> one K=3C
    matmul (biases summed), bf16 casts for the big MXU operands."""
    eps = 1e-5
    bn_scale = (p["gamma"] / jnp.sqrt(p["r_var"] + eps))[:, None]     # (16,1)
    bn_shift = p["beta"][:, None] - p["r_mean"][:, None] * bn_scale
    return {
        "w_dr": p["w_dr"] * bn_scale,
        "b_dr": p["b_dr"] * bn_scale + bn_shift,
        "w_fc": p["w_fc"], "b_fc": p["b_fc"],
        "w_cat": jnp.concatenate([p["w0"], p["w1"], p["w2"]],
                                 axis=1).astype(jnp.bfloat16),        # (C, 3C)
        "b_cat": p["b0"] + p["b1"] + p["b2"],                          # (C, 1)
        "w_ca1": p["w_ca1"], "w_ca2": p["w_ca2"],
        "w4": p["w4"].astype(jnp.bfloat16), "b4": p["b4"],
    }


if __name__ == "__main__":
    N, C, H, W = 2, 32, 16, 16
    key = jax.random.PRNGKey(0)
    kx, kb, kp = jax.random.split(key, 3)

    x = jax.random.normal(kx, (N, C, H, W), dtype=jnp.float32)
    bins = jax.random.normal(kb, (N, 1, H, W), dtype=jnp.float32)
    fused = fuse_params(init_params(kp, C))

    fwd = jax.jit(functools.partial(adaptive_dsam_forward))
    out = jax.block_until_ready(fwd(x, bins, fused))

    assert out.shape == (N, 4, H, W), out.shape
    assert bool(jnp.all(jnp.isfinite(out)))
    print("KERNEL_OK")
</pallas_src>

<mosaic_0001>
module attributes {stable_mosaic.version = 11 : i64} {
  func.func @dsam_kernel(%arg0: i32, %arg1: memref<1x32x256xbf16, #tpu.memory_space<vmem>>, %arg2: memref<1x9x256xf32, #tpu.memory_space<vmem>>, %arg3: memref<16x9xf32, #tpu.memory_space<vmem>>, %arg4: memref<16x1xf32, #tpu.memory_space<vmem>>, %arg5: memref<3x16xf32, #tpu.memory_space<vmem>>, %arg6: memref<3x1xf32, #tpu.memory_space<vmem>>, %arg7: memref<32x96xbf16, #tpu.memory_space<vmem>>, %arg8: memref<32x1xf32, #tpu.memory_space<vmem>>, %arg9: memref<2x32xf32, #tpu.memory_space<vmem>>, %arg10: memref<32x2xf32, #tpu.memory_space<vmem>>, %arg11: memref<4x32xbf16, #tpu.memory_space<vmem>>, %arg12: memref<4x1xf32, #tpu.memory_space<vmem>>, %arg13: memref<1x4x256xf32, #tpu.memory_space<vmem>>) attributes {dimension_semantics = [#tpu.dimension_semantics<parallel>], iteration_bounds = array<i64: 2>, scalar_prefetch = 0 : i64, scratch_operands = 0 : i64, tpu.core_type = #tpu.core_type<tc>, window_params = [{transform_indices = @transform_0, window_bounds = array<i64: 1, 32, 256>}, {transform_indices = @transform_1, window_bounds = array<i64: 1, 9, 256>}, {pipeline_mode = #tpu.pipeline_mode<synchronous>, transform_indices = @transform_2, window_bounds = array<i64: 16, 9>}, {pipeline_mode = #tpu.pipeline_mode<synchronous>, transform_indices = @transform_3, window_bounds = array<i64: 16, 1>}, {pipeline_mode = #tpu.pipeline_mode<synchronous>, transform_indices = @transform_4, window_bounds = array<i64: 3, 16>}, {pipeline_mode = #tpu.pipeline_mode<synchronous>, transform_indices = @transform_5, window_bounds = array<i64: 3, 1>}, {pipeline_mode = #tpu.pipeline_mode<synchronous>, transform_indices = @transform_6, window_bounds = array<i64: 32, 96>}, {pipeline_mode = #tpu.pipeline_mode<synchronous>, transform_indices = @transform_7, window_bounds = array<i64: 32, 1>}, {pipeline_mode = #tpu.pipeline_mode<synchronous>, transform_indices = @transform_8, window_bounds = array<i64: 2, 32>}, {pipeline_mode = #tpu.pipeline_mode<synchronous>, transform_indices = @transform_9, window_bounds = array<i64: 32, 2>}, {pipeline_mode = #tpu.pipeline_mode<synchronous>, transform_indices = @transform_10, window_bounds = array<i64: 4, 32>}, {pipeline_mode = #tpu.pipeline_mode<synchronous>, transform_indices = @transform_11, window_bounds = array<i64: 4, 1>}, {transform_indices = @transform_12, window_bounds = array<i64: 1, 4, 256>}]} {
    %c0 = arith.constant 0 : index
    %c0_0 = arith.constant 0 : index
    %c0_1 = arith.constant 0 : index
    %0 = vector.load %arg1[%c0, %c0_0, %c0_1] : memref<1x32x256xbf16, #tpu.memory_space<vmem>>, vector<1x32x256xbf16>
    %1 = vector.shape_cast %0 : vector<1x32x256xbf16> to vector<32x256xbf16>
    %2 = arith.extf %1 : vector<32x256xbf16> to vector<32x256xf32>
    %c0_2 = arith.constant 0 : index
    %c0_3 = arith.constant 0 : index
    %c0_4 = arith.constant 0 : index
    %3 = vector.load %arg2[%c0_2, %c0_3, %c0_4] : memref<1x9x256xf32, #tpu.memory_space<vmem>>, vector<1x9x256xf32>
    %4 = vector.shape_cast %3 : vector<1x9x256xf32> to vector<9x256xf32>
    %c0_5 = arith.constant 0 : index
    %c0_6 = arith.constant 0 : index
    %5 = vector.load %arg3[%c0_5, %c0_6] : memref<16x9xf32, #tpu.memory_space<vmem>>, vector<16x9xf32>
    %cst = arith.constant dense<0.000000e+00> : vector<16x256xf32>
    %6 = tpu.matmul %5, %4, %cst {dimension_numbers = #tpu.dot_dimension_numbers<[1], [0], [0], [1], [0, 0, 1, 1], [], []>} : vector<16x9xf32>, vector<9x256xf32>, vector<16x256xf32> -> vector<16x256xf32>
    %c0_7 = arith.constant 0 : index
    %c0_8 = arith.constant 0 : index
    %7 = vector.load %arg4[%c0_7, %c0_8] : memref<16x1xf32, #tpu.memory_space<vmem>>, vector<16x1xf32>
    %8 = vector.broadcast %7 : vector<16x1xf32> to vector<16x256xf32>
    %9 = arith.addf %6, %8 : vector<16x256xf32>
    %cst_9 = arith.constant 0.000000e+00 : f32
    %10 = vector.broadcast %cst_9 : f32 to vector<16x256xf32>
    %11 = arith.maximumf %9, %10 : vector<16x256xf32>
    %c0_10 = arith.constant 0 : index
    %c0_11 = arith.constant 0 : index
    %12 = vector.load %arg5[%c0_10, %c0_11] : memref<3x16xf32, #tpu.memory_space<vmem>>, vector<3x16xf32>
    %cst_12 = arith.constant dense<0.000000e+00> : vector<3x256xf32>
    %13 = tpu.matmul %12, %11, %cst_12 {dimension_numbers = #tpu.dot_dimension_numbers<[1], [0], [0], [1], [0, 0, 1, 1], [], []>} : vector<3x16xf32>, vector<16x256xf32>, vector<3x256xf32> -> vector<3x256xf32>
    %c0_13 = arith.constant 0 : index
    %c0_14 = arith.constant 0 : index
    %14 = vector.load %arg6[%c0_13, %c0_14] : memref<3x1xf32, #tpu.memory_space<vmem>>, vector<3x1xf32>
    %15 = vector.broadcast %14 : vector<3x1xf32> to vector<3x256xf32>
    %16 = arith.addf %13, %15 : vector<3x256xf32>
    %17 = vector.extract_strided_slice %16 {offsets = [0, 0], sizes = [1, 256], strides = [1, 1]} : vector<3x256xf32> to vector<1x256xf32>
    %18 = vector.extract_strided_slice %16 {offsets = [1, 0], sizes = [1, 256], strides = [1, 1]} : vector<3x256xf32> to vector<1x256xf32>
    %19 = vector.extract_strided_slice %16 {offsets = [2, 0], sizes = [1, 256], strides = [1, 1]} : vector<3x256xf32> to vector<1x256xf32>
    %20 = arith.cmpf oge, %17, %18 : vector<1x256xf32>
    %21 = arith.cmpf oge, %17, %19 : vector<1x256xf32>
    %22 = arith.andi %20, %21 : vector<1x256xi1>
    %cst_15 = arith.constant dense<true> : vector<1x256xi1>
    %23 = arith.xori %22, %cst_15 : vector<1x256xi1>
    %24 = arith.cmpf oge, %18, %19 : vector<1x256xf32>
    %25 = arith.andi %23, %24 : vector<1x256xi1>
    %cst_16 = arith.constant dense<true> : vector<1x256xi1>
    %26 = arith.xori %22, %cst_16 : vector<1x256xi1>
    %cst_17 = arith.constant dense<true> : vector<1x256xi1>
    %27 = arith.xori %25, %cst_17 : vector<1x256xi1>
    %28 = arith.andi %26, %27 : vector<1x256xi1>
    %cst_18 = arith.constant dense<0.000000e+00> : vector<256xf32>
    %29 = vector.multi_reduction <add>, %11, %cst_18 [0] : vector<16x256xf32> to vector<256xf32>
    %30 = vector.shape_cast %29 : vector<256xf32> to vector<1x256xf32>
    %cst_19 = arith.constant 1.600000e+01 : f32
    %31 = vector.broadcast %cst_19 : f32 to vector<1x256xf32>
    %32 = arith.divf %30, %31 : vector<1x256xf32>
    %33 = vector.broadcast %32 : vector<1x256xf32> to vector<32x256xf32>
    %34 = arith.mulf %2, %33 : vector<32x256xf32>
    %cst_20 = arith.constant 0.000000e+00 : f32
    %35 = vector.broadcast %cst_20 : f32 to vector<32x256xf32>
    %36 = vector.shape_cast %22 : vector<1x256xi1> to vector<1x256xi1>
    %37 = vector.broadcast %36 : vector<1x256xi1> to vector<32x256xi1>
    %38 = arith.select %37, %34, %35 : vector<32x256xi1>, vector<32x256xf32>
    %39 = vector.shape_cast %25 : vector<1x256xi1> to vector<1x256xi1>
    %40 = vector.broadcast %39 : vector<1x256xi1> to vector<32x256xi1>
    %41 = arith.select %40, %34, %35 : vector<32x256xi1>, vector<32x256xf32>
    %42 = vector.shape_cast %28 : vector<1x256xi1> to vector<1x256xi1>
    %43 = vector.broadcast %42 : vector<1x256xi1> to vector<32x256xi1>
    %44 = arith.select %43, %34, %35 : vector<32x256xi1>, vector<32x256xf32>
    %45 = tpu.concatenate %38, %41, %44 in 0 : vector<32x256xf32>, vector<32x256xf32>, vector<32x256xf32> -> vector<96x256xf32>
    %46 = arith.truncf %45 : vector<96x256xf32> to vector<96x256xbf16>
    %c0_21 = arith.constant 0 : index
    %c0_22 = arith.constant 0 : index
    %47 = vector.load %arg7[%c0_21, %c0_22] : memref<32x96xbf16, #tpu.memory_space<vmem>>, vector<32x96xbf16>
    %cst_23 = arith.constant dense<0.000000e+00> : vector<32x256xf32>
    %48 = tpu.matmul %47, %46, %cst_23 {dimension_numbers = #tpu.dot_dimension_numbers<[1], [0], [0], [1], [0, 0, 1, 1], [], []>} : vector<32x96xbf16>, vector<96x256xbf16>, vector<32x256xf32> -> vector<32x256xf32>
    %c0_24 = arith.constant 0 : index
    %c0_25 = arith.constant 0 : index
    %49 = vector.load %arg8[%c0_24, %c0_25] : memref<32x1xf32, #tpu.memory_space<vmem>>, vector<32x1xf32>
    %50 = vector.broadcast %49 : vector<32x1xf32> to vector<32x256xf32>
    %51 = arith.addf %48, %50 : vector<32x256xf32>
    %52 = arith.addf %51, %2 : vector<32x256xf32>
    %cst_26 = arith.constant dense<0.000000e+00> : vector<32xf32>
    %53 = vector.multi_reduction <add>, %52, %cst_26 [1] : vector<32x256xf32> to vector<32xf32>
    %54 = vector.shape_cast %53 : vector<32xf32> to vector<32x1xf32>
    %cst_27 = arith.constant 2.560000e+02 : f32
    %55 = vector.broadcast %cst_27 : f32 to vector<32x1xf32>
    %56 = arith.divf %54, %55 : vector<32x1xf32>
    %c0_28 = arith.constant 0 : index
    %c0_29 = arith.constant 0 : index
    %57 = vector.load %arg9[%c0_28, %c0_29] : memref<2x32xf32, #tpu.memory_space<vmem>>, vector<2x32xf32>
    %cst_30 = arith.constant dense<0.000000e+00> : vector<2x1xf32>
    %58 = tpu.matmul %57, %56, %cst_30 {dimension_numbers = #tpu.dot_dimension_numbers<[1], [0], [0], [1], [0, 0, 1, 1], [], []>} : vector<2x32xf32>, vector<32x1xf32>, vector<2x1xf32> -> vector<2x1xf32>
    %cst_31 = arith.constant 0.000000e+00 : f32
    %59 = vector.broadcast %cst_31 : f32 to vector<2x1xf32>
    %60 = arith.maximumf %58, %59 : vector<2x1xf32>
    %c0_32 = arith.constant 0 : index
    %c0_33 = arith.constant 0 : index
    %61 = vector.load %arg10[%c0_32, %c0_33] : memref<32x2xf32, #tpu.memory_space<vmem>>, vector<32x2xf32>
    %cst_34 = arith.constant dense<0.000000e+00> : vector<32x1xf32>
    %62 = tpu.matmul %61, %60, %cst_34 {dimension_numbers = #tpu.dot_dimension_numbers<[1], [0], [0], [1], [0, 0, 1, 1], [], []>} : vector<32x2xf32>, vector<2x1xf32>, vector<32x1xf32> -> vector<32x1xf32>
    %63 = arith.negf %62 : vector<32x1xf32>
    %64 = math.exp %63 : vector<32x1xf32>
    %cst_35 = arith.constant 1.000000e+00 : f32
    %65 = vector.broadcast %cst_35 : f32 to vector<32x1xf32>
    %66 = arith.addf %65, %64 : vector<32x1xf32>
    %67 = arith.divf %65, %66 : vector<32x1xf32>
    %68 = vector.broadcast %67 : vector<32x1xf32> to vector<32x256xf32>
    %69 = arith.mulf %52, %68 : vector<32x256xf32>
    %c0_36 = arith.constant 0 : index
    %c0_37 = arith.constant 0 : index
    %70 = vector.load %arg11[%c0_36, %c0_37] : memref<4x32xbf16, #tpu.memory_space<vmem>>, vector<4x32xbf16>
    %71 = arith.truncf %69 : vector<32x256xf32> to vector<32x256xbf16>
    %cst_38 = arith.constant dense<0.000000e+00> : vector<4x256xf32>
    %72 = tpu.matmul %70, %71, %cst_38 {dimension_numbers = #tpu.dot_dimension_numbers<[1], [0], [0], [1], [0, 0, 1, 1], [], []>} : vector<4x32xbf16>, vector<32x256xbf16>, vector<4x256xf32> -> vector<4x256xf32>
    %c0_39 = arith.constant 0 : index
    %c0_40 = arith.constant 0 : index
    %73 = vector.load %arg12[%c0_39, %c0_40] : memref<4x1xf32, #tpu.memory_space<vmem>>, vector<4x1xf32>
    %74 = vector.broadcast %73 : vector<4x1xf32> to vector<4x256xf32>
    %75 = arith.addf %72, %74 : vector<4x256xf32>
    %c0_41 = arith.constant 0 : index
    %c0_42 = arith.constant 0 : index
    %c0_43 = arith.constant 0 : index
    %76 = vector.load %arg13[%c0_41, %c0_42, %c0_43] : memref<1x4x256xf32, #tpu.memory_space<vmem>>, vector<1x4x256xf32>
    %77 = vector.shape_cast %76 : vector<1x4x256xf32> to vector<4x256xf32>
    %78 = vector.shape_cast %75 : vector<4x256xf32> to vector<1x4x256xf32>
    tpu.vector_store %arg13[%c0_41, %c0_42, %c0_43], %78 {strides = array<i32>} : memref<1x4x256xf32, #tpu.memory_space<vmem>>, vector<1x4x256xf32>,
    return
  }
  func.func @transform_0(%arg0: i32) -> (i32, i32, i32) {
    %c0_i32 = arith.constant 0 : i32
    %c0_i32_0 = arith.constant 0 : i32
    %c0_i32_1 = arith.constant 0 : i32
    return %arg0, %c0_i32, %c0_i32_0 : i32, i32, i32
  }
  func.func @transform_1(%arg0: i32) -> (i32, i32, i32) {
    %c0_i32 = arith.constant 0 : i32
    %c0_i32_0 = arith.constant 0 : i32
    %c0_i32_1 = arith.constant 0 : i32
    return %arg0, %c0_i32, %c0_i32_0 : i32, i32, i32
  }
  func.func @transform_2(%arg0: i32) -> (i32, i32) {
    %c0_i32 = arith.constant 0 : i32
    %c0_i32_0 = arith.constant 0 : i32
    %c0_i32_1 = arith.constant 0 : i32
    return %c0_i32, %c0_i32_0 : i32, i32
  }
  func.func @transform_3(%arg0: i32) -> (i32, i32) {
    %c0_i32 = arith.constant 0 : i32
    %c0_i32_0 = arith.constant 0 : i32
    %c0_i32_1 = arith.constant 0 : i32
    return %c0_i32, %c0_i32_0 : i32, i32
  }
  func.func @transform_4(%arg0: i32) -> (i32, i32) {
    %c0_i32 = arith.constant 0 : i32
    %c0_i32_0 = arith.constant 0 : i32
    %c0_i32_1 = arith.constant 0 : i32
    return %c0_i32, %c0_i32_0 : i32, i32
  }
  func.func @transform_5(%arg0: i32) -> (i32, i32) {
    %c0_i32 = arith.constant 0 : i32
    %c0_i32_0 = arith.constant 0 : i32
    %c0_i32_1 = arith.constant 0 : i32
    return %c0_i32, %c0_i32_0 : i32, i32
  }
  func.func @transform_6(%arg0: i32) -> (i32, i32) {
    %c0_i32 = arith.constant 0 : i32
    %c0_i32_0 = arith.constant 0 : i32
    %c0_i32_1 = arith.constant 0 : i32
    return %c0_i32, %c0_i32_0 : i32, i32
  }
  func.func @transform_7(%arg0: i32) -> (i32, i32) {
    %c0_i32 = arith.constant 0 : i32
    %c0_i32_0 = arith.constant 0 : i32
    %c0_i32_1 = arith.constant 0 : i32
    return %c0_i32, %c0_i32_0 : i32, i32
  }
  func.func @transform_8(%arg0: i32) -> (i32, i32) {
    %c0_i32 = arith.constant 0 : i32
    %c0_i32_0 = arith.constant 0 : i32
    %c0_i32_1 = arith.constant 0 : i32
    return %c0_i32, %c0_i32_0 : i32, i32
  }
  func.func @transform_9(%arg0: i32) -> (i32, i32) {
    %c0_i32 = arith.constant 0 : i32
    %c0_i32_0 = arith.constant 0 : i32
    %c0_i32_1 = arith.constant 0 : i32
    return %c0_i32, %c0_i32_0 : i32, i32
  }
  func.func @transform_10(%arg0: i32) -> (i32, i32) {
    %c0_i32 = arith.constant 0 : i32
    %c0_i32_0 = arith.constant 0 : i32
    %c0_i32_1 = arith.constant 0 : i32
    return %c0_i32, %c0_i32_0 : i32, i32
  }
  func.func @transform_11(%arg0: i32) -> (i32, i32) {
    %c0_i32 = arith.constant 0 : i32
    %c0_i32_0 = arith.constant 0 : i32
    %c0_i32_1 = arith.constant 0 : i32
    return %c0_i32, %c0_i32_0 : i32, i32
  }
  func.func @transform_12(%arg0: i32) -> (i32, i32, i32) {
    %c0_i32 = arith.constant 0 : i32
    %c0_i32_0 = arith.constant 0 : i32
    %c0_i32_1 = arith.constant 0 : i32
    return %arg0, %c0_i32, %c0_i32_0 : i32, i32, i32
  }
}

</mosaic_0001>

<llo_original>
// kernel: adaptive_dsam_forward.1
$region0: #{adaptive_dsam_forward.1}
  #allocation0 [shape = 'u32[]', space=smem, size = 0x4, offset = 0x4, fixed_abs, tag = 'smem constant byte address 0x4 - core index']
  #allocation1 [shape = 'u32[144,128]{1,0:T(1,128)}', space=vmem, size = 0x12000, scoped, tag = 'internal scratch']
  %s0 = inlined_call_operand.vmem [shape: bf16[2,32,256], index: 0, kind: input, shape index: {}]
  %s1 = inlined_call_operand.vmem [shape: f32[2,9,256], index: 1, kind: input, shape index: {}]
  %s2 = inlined_call_operand.vmem [shape: f32[16,9], index: 2, kind: input, shape index: {}]
  %s3 = inlined_call_operand.vmem [shape: f32[16,1], index: 3, kind: input, shape index: {}]
  %s4 = inlined_call_operand.vmem [shape: f32[3,16], index: 4, kind: input, shape index: {}]
  %s5 = inlined_call_operand.vmem [shape: f32[3,1], index: 5, kind: input, shape index: {}]
  %s6 = inlined_call_operand.vmem [shape: bf16[32,96], index: 6, kind: input, shape index: {}]
  %s7 = inlined_call_operand.vmem [shape: f32[32,1], index: 7, kind: input, shape index: {}]
  %s8 = inlined_call_operand.vmem [shape: f32[2,32], index: 8, kind: input, shape index: {}]
  %s9 = inlined_call_operand.vmem [shape: f32[32,2], index: 9, kind: input, shape index: {}]
  %s10 = inlined_call_operand.vmem [shape: bf16[4,32], index: 10, kind: input, shape index: {}]
  %s11 = inlined_call_operand.vmem [shape: f32[4,1], index: 11, kind: input, shape index: {}]
  %s12 = inlined_call_operand.vmem [shape: f32[2,4,256], index: 12, kind: output, shape index: {}]
  %s13 = sld [smem:[#allocation0]]
  $region81: #{adaptive_dsam_forward.1} parent=0
    _
  %s15 = ssub.s32 1, %s13
  %s16 = scalar_select 0, %s15, %s13
  loop: start=0, step=1, limit=4
  $region2: #{adaptive_dsam_forward.1} parent=0 // loop_pre_header
    _
  $region3: #{adaptive_dsam_forward.1} parent=0 // loop_header
    %s18 = sphi 0, %s22
    %p19 = scmp.ge.s32.totalorder %s18, 4
    %s28 = sphi 0, %s30
    %s31 = sphi 0, %s28
    %s32 = sphi 0, %s31
    %s48 = sphi 0, %s32
    %s54 = sphi 0, %s56
    %s57 = sphi 0, %s54
    %s58 = sphi 0, %s57
    %s74 = sphi 0, %s58
    %s78 = sphi 0, %s78
    %s80 = sphi 0, %s78
    %s81 = sphi 0, %s80
    %s95 = sphi 0, %s81
    %s99 = sphi 0, %s99
    %s101 = sphi 0, %s99
    %s102 = sphi 0, %s101
    %s116 = sphi 0, %s102
    %s120 = sphi 0, %s120
    %s122 = sphi 0, %s120
    %s123 = sphi 0, %s122
    %s137 = sphi 0, %s123
    %s141 = sphi 0, %s141
    %s143 = sphi 0, %s141
    %s144 = sphi 0, %s143
    %s158 = sphi 0, %s144
    %s162 = sphi 0, %s162
    %s164 = sphi 0, %s162
    %s165 = sphi 0, %s164
    %s179 = sphi 0, %s165
    %s183 = sphi 0, %s183
    %s185 = sphi 0, %s183
    %s186 = sphi 0, %s185
    %s200 = sphi 0, %s186
    %s204 = sphi 0, %s204
    %s206 = sphi 0, %s204
    %s207 = sphi 0, %s206
    %s221 = sphi 0, %s207
    %s225 = sphi 0, %s225
    %s227 = sphi 0, %s225
    %s228 = sphi 0, %s227
    %s242 = sphi 0, %s228
    %s246 = sphi 0, %s246
    %s248 = sphi 0, %s246
    %s249 = sphi 0, %s248
    %s263 = sphi 0, %s249
    %s267 = sphi 0, %s267
    %s269 = sphi 0, %s267
    %s270 = sphi 0, %s269
    %s284 = sphi 0, %s270
    %s290 = sphi 0, %s292
    %s293 = sphi 0, %s290
    %s294 = sphi 0, %s293
    %s310 = sphi 0, %s294
  $region4: #{adaptive_dsam_forward.1} parent=0 // loop_header_branch
    %21 = sbr.rel (%p19) target = $region8
  $region5: #{adaptive_dsam_forward.1} parent=0 // loop_body
    %s23 = ssub.s32 %s18, 1
    %s24 = ssub.s32 %s18, 2
    %s25 = sadd.s32 %s18, 1
    %s26 = ssub.s32 %s18, %s25
    %p27 = scmp.eq.s32.totalorder %s26, 0
    %s29 = sadd.s32 %s28, 1
    %s30 = scalar_select %p27, %s28, %s29
    %p33 = pneg %p27
    %p34 = scmp.eq.s32.totalorder %s18, 1
    %p35 = por %p33, %p34
    %p36 = scmp.ne.s32.totalorder %s28, %s31
    %p37 = scmp.eq.s32.totalorder %s18, 0
    %p38 = por %p36, %p37
    %p39 = scmp.ne.s32.totalorder %s28, %s31
    %p40 = scmp.eq.s32.totalorder %s23, 1
    %p41 = por %p39, %p40
    %p42 = scmp.ne.s32.totalorder %s31, %s32
    %p43 = scmp.eq.s32.totalorder %s23, 0
    %p44 = por %p42, %p43
    %p45 = scmp.ne.s32.totalorder %s31, %s32
    %p46 = scmp.eq.s32.totalorder %s24, 1
    %p47 = por %p45, %p46
    %p49 = scmp.ne.s32.totalorder %s32, %s48
    %p50 = scmp.eq.s32.totalorder %s24, 0
    %p51 = por %p49, %p50
    %s52 = ssub.s32 %s18, %s25
    %p53 = scmp.eq.s32.totalorder %s52, 0
    %s55 = sadd.s32 %s54, 1
    %s56 = scalar_select %p53, %s54, %s55
    %p59 = pneg %p53
    %p60 = scmp.eq.s32.totalorder %s18, 1
    %p61 = por %p59, %p60
    %p62 = scmp.ne.s32.totalorder %s54, %s57
    %p63 = scmp.eq.s32.totalorder %s18, 0
    %p64 = por %p62, %p63
    %p65 = scmp.ne.s32.totalorder %s54, %s57
    %p66 = scmp.eq.s32.totalorder %s23, 1
    %p67 = por %p65, %p66
    %p68 = scmp.ne.s32.totalorder %s57, %s58
    %p69 = scmp.eq.s32.totalorder %s23, 0
    %p70 = por %p68, %p69
    %p71 = scmp.ne.s32.totalorder %s57, %s58
    %p72 = scmp.eq.s32.totalorder %s24, 1
    %p73 = por %p71, %p72
    %p75 = scmp.ne.s32.totalorder %s58, %s74
    %p76 = scmp.eq.s32.totalorder %s24, 0
    %p77 = por %p75, %p76
    %s79 = sadd.s32 %s78, 1
    %p82 = scmp.eq.s32.totalorder %s18, 1
    %p83 = scmp.ne.s32.totalorder %s78, %s80
    %p84 = scmp.eq.s32.totalorder %s18, 0
    %p85 = por %p83, %p84
    %p86 = scmp.ne.s32.totalorder %s78, %s80
    %p87 = scmp.eq.s32.totalorder %s23, 1
    %p88 = por %p86, %p87
    %p89 = scmp.ne.s32.totalorder %s80, %s81
    %p90 = scmp.eq.s32.totalorder %s23, 0
    %p91 = por %p89, %p90
    %p92 = scmp.ne.s32.totalorder %s80, %s81
    %p93 = scmp.eq.s32.totalorder %s24, 1
    %p94 = por %p92, %p93
    %p96 = scmp.ne.s32.totalorder %s81, %s95
    %p97 = scmp.eq.s32.totalorder %s24, 0
    %p98 = por %p96, %p97
    %s100 = sadd.s32 %s99, 1
    %p103 = scmp.eq.s32.totalorder %s18, 1
    %p104 = scmp.ne.s32.totalorder %s99, %s101
    %p105 = scmp.eq.s32.totalorder %s18, 0
    %p106 = por %p104, %p105
    %p107 = scmp.ne.s32.totalorder %s99, %s101
    %p108 = scmp.eq.s32.totalorder %s23, 1
    %p109 = por %p107, %p108
    %p110 = scmp.ne.s32.totalorder %s101, %s102
    %p111 = scmp.eq.s32.totalorder %s23, 0
    %p112 = por %p110, %p111
    %p113 = scmp.ne.s32.totalorder %s101, %s102
    %p114 = scmp.eq.s32.totalorder %s24, 1
    %p115 = por %p113, %p114
    %p117 = scmp.ne.s32.totalorder %s102, %s116
    %p118 = scmp.eq.s32.totalorder %s24, 0
    %p119 = por %p117, %p118
    %s121 = sadd.s32 %s120, 1
    %p124 = scmp.eq.s32.totalorder %s18, 1
    %p125 = scmp.ne.s32.totalorder %s120, %s122
    %p126 = scmp.eq.s32.totalorder %s18, 0
    %p127 = por %p125, %p126
    %p128 = scmp.ne.s32.totalorder %s120, %s122
    %p129 = scmp.eq.s32.totalorder %s23, 1
    %p130 = por %p128, %p129
    %p131 = scmp.ne.s32.totalorder %s122, %s123
    %p132 = scmp.eq.s32.totalorder %s23, 0
    %p133 = por %p131, %p132
    %p134 = scmp.ne.s32.totalorder %s122, %s123
    %p135 = scmp.eq.s32.totalorder %s24, 1
    %p136 = por %p134, %p135
    %p138 = scmp.ne.s32.totalorder %s123, %s137
    %p139 = scmp.eq.s32.totalorder %s24, 0
    %p140 = por %p138, %p139
    %s142 = sadd.s32 %s141, 1
    %p145 = scmp.eq.s32.totalorder %s18, 1
    %p146 = scmp.ne.s32.totalorder %s141, %s143
    %p147 = scmp.eq.s32.totalorder %s18, 0
    %p148 = por %p146, %p147
    %p149 = scmp.ne.s32.totalorder %s141, %s143
    %p150 = scmp.eq.s32.totalorder %s23, 1
    %p151 = por %p149, %p150
    %p152 = scmp.ne.s32.totalorder %s143, %s144
    %p153 = scmp.eq.s32.totalorder %s23, 0
    %p154 = por %p152, %p153
    %p155 = scmp.ne.s32.totalorder %s143, %s144
    %p156 = scmp.eq.s32.totalorder %s24, 1
    %p157 = por %p155, %p156
    %p159 = scmp.ne.s32.totalorder %s144, %s158
    %p160 = scmp.eq.s32.totalorder %s24, 0
    %p161 = por %p159, %p160
    %s163 = sadd.s32 %s162, 1
    %p166 = scmp.eq.s32.totalorder %s18, 1
    %p167 = scmp.ne.s32.totalorder %s162, %s164
    %p168 = scmp.eq.s32.totalorder %s18, 0
    %p169 = por %p167, %p168
    %p170 = scmp.ne.s32.totalorder %s162, %s164
    %p171 = scmp.eq.s32.totalorder %s23, 1
    %p172 = por %p170, %p171
    %p173 = scmp.ne.s32.totalorder %s164, %s165
    %p174 = scmp.eq.s32.totalorder %s23, 0
    %p175 = por %p173, %p174
    %p176 = scmp.ne.s32.totalorder %s164, %s165
    %p177 = scmp.eq.s32.totalorder %s24, 1
    %p178 = por %p176, %p177
    %p180 = scmp.ne.s32.totalorder %s165, %s179
    %p181 = scmp.eq.s32.totalorder %s24, 0
    %p182 = por %p180, %p181
    %s184 = sadd.s32 %s183, 1
    %p187 = scmp.eq.s32.totalorder %s18, 1
    %p188 = scmp.ne.s32.totalorder %s183, %s185
    %p189 = scmp.eq.s32.totalorder %s18, 0
    %p190 = por %p188, %p189
    %p191 = scmp.ne.s32.totalorder %s183, %s185
    %p192 = scmp.eq.s32.totalorder %s23, 1
    %p193 = por %p191, %p192
    %p194 = scmp.ne.s32.totalorder %s185, %s186
    %p195 = scmp.eq.s32.totalorder %s23, 0
    %p196 = por %p194, %p195
    %p197 = scmp.ne.s32.totalorder %s185, %s186
    %p198 = scmp.eq.s32.totalorder %s24, 1
    %p199 = por %p197, %p198
    %p201 = scmp.ne.s32.totalorder %s186, %s200
    %p202 = scmp.eq.s32.totalorder %s24, 0
    %p203 = por %p201, %p202
    %s205 = sadd.s32 %s204, 1
    %p208 = scmp.eq.s32.totalorder %s18, 1
    %p209 = scmp.ne.s32.totalorder %s204, %s206
    %p210 = scmp.eq.s32.totalorder %s18, 0
    %p211 = por %p209, %p210
    %p212 = scmp.ne.s32.totalorder %s204, %s206
    %p213 = scmp.eq.s32.totalorder %s23, 1
    %p214 = por %p212, %p213
    %p215 = scmp.ne.s32.totalorder %s206, %s207
    %p216 = scmp.eq.s32.totalorder %s23, 0
    %p217 = por %p215, %p216
    %p218 = scmp.ne.s32.totalorder %s206, %s207
    %p219 = scmp.eq.s32.totalorder %s24, 1
    %p220 = por %p218, %p219
    %p222 = scmp.ne.s32.totalorder %s207, %s221
    %p223 = scmp.eq.s32.totalorder %s24, 0
    %p224 = por %p222, %p223
    %s226 = sadd.s32 %s225, 1
    %p229 = scmp.eq.s32.totalorder %s18, 1
    %p230 = scmp.ne.s32.totalorder %s225, %s227
    %p231 = scmp.eq.s32.totalorder %s18, 0
    %p232 = por %p230, %p231
    %p233 = scmp.ne.s32.totalorder %s225, %s227
    %p234 = scmp.eq.s32.totalorder %s23, 1
    %p235 = por %p233, %p234
    %p236 = scmp.ne.s32.totalorder %s227, %s228
    %p237 = scmp.eq.s32.totalorder %s23, 0
    %p238 = por %p236, %p237
    %p239 = scmp.ne.s32.totalorder %s227, %s228
    %p240 = scmp.eq.s32.totalorder %s24, 1
    %p241 = por %p239, %p240
    %p243 = scmp.ne.s32.totalorder %s228, %s242
    %p244 = scmp.eq.s32.totalorder %s24, 0
    %p245 = por %p243, %p244
    %s247 = sadd.s32 %s246, 1
    %p250 = scmp.eq.s32.totalorder %s18, 1
    %p251 = scmp.ne.s32.totalorder %s246, %s248
    %p252 = scmp.eq.s32.totalorder %s18, 0
    %p253 = por %p251, %p252
    %p254 = scmp.ne.s32.totalorder %s246, %s248
    %p255 = scmp.eq.s32.totalorder %s23, 1
    %p256 = por %p254, %p255
    %p257 = scmp.ne.s32.totalorder %s248, %s249
    %p258 = scmp.eq.s32.totalorder %s23, 0
    %p259 = por %p257, %p258
    %p260 = scmp.ne.s32.totalorder %s248, %s249
    %p261 = scmp.eq.s32.totalorder %s24, 1
    %p262 = por %p260, %p261
    %p264 = scmp.ne.s32.totalorder %s249, %s263
    %p265 = scmp.eq.s32.totalorder %s24, 0
    %p266 = por %p264, %p265
    %s268 = sadd.s32 %s267, 1
    %p271 = scmp.eq.s32.totalorder %s18, 1
    %p272 = scmp.ne.s32.totalorder %s267, %s269
    %p273 = scmp.eq.s32.totalorder %s18, 0
    %p274 = por %p272, %p273
    %p275 = scmp.ne.s32.totalorder %s267, %s269
    %p276 = scmp.eq.s32.totalorder %s23, 1
    %p277 = por %p275, %p276
    %p278 = scmp.ne.s32.totalorder %s269, %s270
    %p279 = scmp.eq.s32.totalorder %s23, 0
    %p280 = por %p278, %p279
    %p281 = scmp.ne.s32.totalorder %s269, %s270
    %p282 = scmp.eq.s32.totalorder %s24, 1
    %p283 = por %p281, %p282
    %p285 = scmp.ne.s32.totalorder %s270, %s284
    %p286 = scmp.eq.s32.totalorder %s24, 0
    %p287 = por %p285, %p286
    %s288 = ssub.s32 %s18, %s25
    %p289 = scmp.eq.s32.totalorder %s288, 0
    %s291 = sadd.s32 %s290, 1
    %s292 = scalar_select %p289, %s290, %s291
    %p295 = pneg %p289
    %p296 = scmp.eq.s32.totalorder %s18, 1
    %p297 = por %p295, %p296
    %p298 = scmp.ne.s32.totalorder %s290, %s293
    %p299 = scmp.eq.s32.totalorder %s18, 0
    %p300 = por %p298, %p299
    %p301 = scmp.ne.s32.totalorder %s290, %s293
    %p302 = scmp.eq.s32.totalorder %s23, 1
    %p303 = por %p301, %p302
    %p304 = scmp.ne.s32.totalorder %s293, %s294
    %p305 = scmp.eq.s32.totalorder %s23, 0
    %p306 = por %p304, %p305
    %p307 = scmp.ne.s32.totalorder %s293, %s294
    %p308 = scmp.eq.s32.totalorder %s24, 1
    %p309 = por %p307, %p308
    %p311 = scmp.ne.s32.totalorder %s294, %s310
    %p312 = scmp.eq.s32.totalorder %s24, 0
    %p313 = por %p311, %p312
    %p314 = scmp.le.s32.totalorder 1, %s18
    %p315 = scmp.lt.s32.totalorder %s18, 3
    %p316 = pnand %p314, %p315
    %p317 = pneg %p316
    // Predicated region
    $region9: #{adaptive_dsam_forward.1} parent=5 // pred_check
      _
    $region10: #{adaptive_dsam_forward.1} parent=5 // pred_check_branch
      %319 = sbr.rel (%p316) target = $region12
    $region11: #{adaptive_dsam_forward.1} parent=5 // pred_region
      %s320 = ssub.s32 %s18, 1
      // Predicated region
      $region13: #{adaptive_dsam_forward.1} parent=11 // pred_check
        %p321 = pneg %p91
      $region14: #{adaptive_dsam_forward.1} parent=11 // pred_check_branch
        %323 = sbr.rel (%p321) target = $region16
      $region15: #{adaptive_dsam_forward.1} parent=11 // pred_region
        _
      $region16: #{adaptive_dsam_forward.1} parent=11 // pred_fallthru
        _
      // Predicated region
      $region17: #{adaptive_dsam_forward.1} parent=11 // pred_check
        %p324 = pneg %p112
      $region18: #{adaptive_dsam_forward.1} parent=11 // pred_check_branch
        %326 = sbr.rel (%p324) target = $region20
      $region19: #{adaptive_dsam_forward.1} parent=11 // pred_region
        _
      $region20: #{adaptive_dsam_forward.1} parent=11 // pred_fallthru
        _
      // Predicated region
      $region21: #{adaptive_dsam_forward.1} parent=11 // pred_check
        %p327 = pneg %p133
      $region22: #{adaptive_dsam_forward.1} parent=11 // pred_check_branch
        %329 = sbr.rel (%p327) target = $region24
      $region23: #{adaptive_dsam_forward.1} parent=11 // pred_region
        _
      $region24: #{adaptive_dsam_forward.1} parent=11 // pred_fallthru
        _
      // Predicated region
      $region25: #{adaptive_dsam_forward.1} parent=11 // pred_check
        %p330 = pneg %p154
      $region26: #{adaptive_dsam_forward.1} parent=11 // pred_check_branch
        %332 = sbr.rel (%p330) target = $region28
      $region27: #{adaptive_dsam_forward.1} parent=11 // pred_region
        _
      $region28: #{adaptive_dsam_forward.1} parent=11 // pred_fallthru
        _
      // Predicated region
      $region29: #{adaptive_dsam_forward.1} parent=11 // pred_check
        %p333 = pneg %p175
      $region30: #{adaptive_dsam_forward.1} parent=11 // pred_check_branch
        %335 = sbr.rel (%p333) target = $region32
      $region31: #{adaptive_dsam_forward.1} parent=11 // pred_region
        _
      $region32: #{adaptive_dsam_forward.1} parent=11 // pred_fallthru
        _
      // Predicated region
      $region33: #{adaptive_dsam_forward.1} parent=11 // pred_check
        %p336 = pneg %p196
      $region34: #{adaptive_dsam_forward.1} parent=11 // pred_check_branch
        %338 = sbr.rel (%p336) target = $region36
      $region35: #{adaptive_dsam_forward.1} parent=11 // pred_region
        _
      $region36: #{adaptive_dsam_forward.1} parent=11 // pred_fallthru
        _
      // Predicated region
      $region37: #{adaptive_dsam_forward.1} parent=11 // pred_check
        %p339 = pneg %p217
      $region38: #{adaptive_dsam_forward.1} parent=11 // pred_check_branch
        %341 = sbr.rel (%p339) target = $region40
      $region39: #{adaptive_dsam_forward.1} parent=11 // pred_region
        _
      $region40: #{adaptive_dsam_forward.1} parent=11 // pred_fallthru
        _
      // Predicated region
      $region41: #{adaptive_dsam_forward.1} parent=11 // pred_check
        %p342 = pneg %p238
      $region42: #{adaptive_dsam_forward.1} parent=11 // pred_check_branch
        %344 = sbr.rel (%p342) target = $region44
      $region43: #{adaptive_dsam_forward.1} parent=11 // pred_region
        _
      $region44: #{adaptive_dsam_forward.1} parent=11 // pred_fallthru
        _
      // Predicated region
      $region45: #{adaptive_dsam_forward.1} parent=11 // pred_check
        %p345 = pneg %p259
      $region46: #{adaptive_dsam_forward.1} parent=11 // pred_check_branch
        %347 = sbr.rel (%p345) target = $region48
      $region47: #{adaptive_dsam_forward.1} parent=11 // pred_region
        _
      $region48: #{adaptive_dsam_forward.1} parent=11 // pred_fallthru
        _
      // Predicated region
      $region49: #{adaptive_dsam_forward.1} parent=11 // pred_check
        %p348 = pneg %p280
      $region50: #{adaptive_dsam_forward.1} parent=11 // pred_check_branch
        %350 = sbr.rel (%p348) target = $region52
      $region51: #{adaptive_dsam_forward.1} parent=11 // pred_region
        _
      $region52: #{adaptive_dsam_forward.1} parent=11 // pred_fallthru
        _
    $region12: #{adaptive_dsam_forward.1} parent=5 // pred_fallthru
      _
    %p351 = scmp.lt.s32.totalorder %s18, 2
    // Predicated region
    $region53: #{adaptive_dsam_forward.1} parent=5 // pred_check
      %p352 = pneg %p351
    $region54: #{adaptive_dsam_forward.1} parent=5 // pred_check_branch
      %354 = sbr.rel (%p352) target = $region56
    $region55: #{adaptive_dsam_forward.1} parent=5 // pred_region
      // Predicated region
      $region57: #{adaptive_dsam_forward.1} parent=55 // pred_check
        %p355 = pneg %p38
      $region58: #{adaptive_dsam_forward.1} parent=55 // pred_check_branch
        %357 = sbr.rel (%p355) target = $region60
      $region59: #{adaptive_dsam_forward.1} parent=55 // pred_region
        %p358 = scmp.lt.s32.totalorder %s18, 1
        %s359 = scalar_select %p358, %s18, 1
        %s360 = smul.addr %s359, 8
        %s361 = smul.addr %s360, 4
        %s362 = scalar_lea.vmem %s0, %s361
      $region60: #{adaptive_dsam_forward.1} parent=55 // pred_fallthru
        _
      // Predicated region
      $region61: #{adaptive_dsam_forward.1} parent=55 // pred_check
        %p363 = pneg %p64
      $region62: #{adaptive_dsam_forward.1} parent=55 // pred_check_branch
        %365 = sbr.rel (%p363) target = $region64
      $region63: #{adaptive_dsam_forward.1} parent=55 // pred_region
        %p366 = scmp.lt.s32.totalorder %s18, 1
        %s367 = scalar_select %p366, %s18, 1
        %s368 = smul.addr %s367, 4
        %s369 = smul.addr %s368, 8
        %s370 = scalar_lea.vmem %s1, %s369
      $region64: #{adaptive_dsam_forward.1} parent=55 // pred_fallthru
        _
    $region56: #{adaptive_dsam_forward.1} parent=5 // pred_fallthru
      _
    %p371 = scmp.le.s32.totalorder 1, %s18
    %p372 = scmp.lt.s32.totalorder %s18, 3
    %p373 = pnand %p371, %p372
    %p374 = pneg %p373
    // Predicated region
    $region65: #{adaptive_dsam_forward.1} parent=5 // pred_check
      _
    $region66: #{adaptive_dsam_forward.1} parent=5 // pred_check_branch
      %376 = sbr.rel (%p373) target = $region68
    $region67: #{adaptive_dsam_forward.1} parent=5 // pred_region
      %s377 = ssub.s32 %s18, 1
      %p378 = scmp.lt.s32.totalorder %s23, 1
      %s379 = scalar_select %p378, %s23, 1
      %s380 = smul.addr %s379, 8
      %s381 = smul.addr %s380, 4
      %s382 = scalar_lea.vmem %s0, %s381
      %p383 = pneg %p44
      %p384 = pneg %p41
      %p385 = scmp.lt.s32.totalorder %s23, 1
      %s386 = scalar_select %p385, %s23, 1
      %s387 = smul.addr %s386, 4
      %s388 = smul.addr %s387, 8
      %s389 = scalar_lea.vmem %s1, %s388
      %p390 = pneg %p70
      %p391 = pneg %p67
      %p392 = pneg %p91
      %p393 = pneg %p88
      %p394 = pneg %p112
      %p395 = pneg %p109
      %p396 = pneg %p133
      %p397 = pneg %p130
      %p398 = pneg %p154
      %p399 = pneg %p151
      %p400 = pneg %p175
      %p401 = pneg %p172
      %p402 = pneg %p196
      %p403 = pneg %p193
      %p404 = pneg %p217
      %p405 = pneg %p214
      %p406 = pneg %p238
      %p407 = pneg %p235
      %p408 = pneg %p259
      %p409 = pneg %p256
      %p410 = pneg %p280
      %p411 = pneg %p277
      %p412 = pneg %p306
      %p413 = pneg %p303
      %p414 = scmp.lt.s32.totalorder %s23, 1
      %s415 = scalar_select %p414, %s23, 1
      %s416 = smul.addr %s415, 2
      %s417 = smul.addr %s416, 4
      %s418 = scalar_lea.vmem %s12, %s417
      %p419 = scmp.lt.s32.totalorder %s23, 1
      %s420 = scalar_select %p419, %s23, 1
      %s421 = smul.addr %s420, 8
      %s422 = smul.addr %s421, 4
      %s423 = scalar_lea.vmem %s0, %s422
      %p424 = scmp.lt.s32.totalorder %s23, 1
      %s425 = scalar_select %p424, %s23, 1
      %s426 = smul.addr %s425, 4
      %s427 = smul.addr %s426, 8
      %s428 = scalar_lea.vmem %s1, %s427
      %p429 = scmp.lt.s32.totalorder %s23, 1
      %s430 = scalar_select %p429, %s23, 1
      %s431 = smul.addr %s430, 2
      %s432 = smul.addr %s431, 4
      %s433 = scalar_lea.vmem %s12, %s432
      %v435 = vld [vmem:[%s423] sm:$0xff]
      %v436 = vld [vmem:[%s423 + $0x8] sm:$0xff]
      %v437 = vld [vmem:[%s423 + $0x10] sm:$0xff]
      %v438 = vld [vmem:[%s423 + $0x18] sm:$0xff]
      %v439 = vunpack.c.l.bf16 %v435
      %v440 = vunpack.c.h.bf16 %v435
      %v441 = vunpack.c.l.bf16 %v436
      %v442 = vunpack.c.h.bf16 %v436
      %v443 = vunpack.c.l.bf16 %v437
      %v444 = vunpack.c.h.bf16 %v437
      %v445 = vunpack.c.l.bf16 %v438
      %v446 = vunpack.c.h.bf16 %v438
      %v447 = vld [vmem:[%s428] sm:$0xff]
      %v448 = vld [vmem:[%s428 + $0x8] sm:$0xff]
      %v449 = vld [vmem:[%s428 + $0x10] sm:$0x1]
      %v450 = vld [vmem:[%s428 + $0x18] sm:$0x1]
      %v451 = vld [vmem:[%s2] sm:$0xff]
      %v452 = vld [vmem:[%s2 + $0x8] sm:$0xff]
      %v453 = vld [vmem:[%s3] sm:$0xff]
      %v454 = vld [vmem:[%s3 + $0x8] sm:$0xff]
      %456 = vset.pattern.permute.xlu0 0
      %457 = vperm.xlu0 %456, %v453
      %v458 = vpop.permute.xlu0 %457
      %461 = vset.pattern.permute.xlu0 0
      %462 = vperm.xlu0 %461, %v454
      %v463 = vpop.permute.xlu0 %462
      %vm465 = vcmask 72704
      %v467 = vsel %vm465, %v451, 0
      %v470 = vsel %vm465, %v452, 0
      %vm472 = vcmask 1040384
      %v474 = vsel %vm472, %v449, 0
      %v477 = vsel %vm472, %v450, 0
      %479 = vmatprep.subr.mxu0 %v448
      %480 = vmatpush1.msra.mxu0 %v447
      %481 = vmatprep.subr.mxu0 %v477
      %482 = vmatpush1.msra.mxu0 %v474
      %483 = vmatprep.subr.mxu0 0.0
      %484 = vmatpush1.msra.mxu0 0.0
      %485 = vmatprep.subr.mxu0 0.0
      %486 = vmatpush1.msra.mxu0 0.0
      %487 = vmatprep.subr.mxu0 0.0
      %488 = vmatpush1.msra.mxu0 0.0
      %489 = vmatprep.subr.mxu0 0.0
      %490 = vmatpush1.msra.mxu0 0.0
      %491 = vmatprep.subr.mxu0 0.0
      %492 = vmatpush1.msra.mxu0 0.0
      %493 = vmatprep.subr.mxu0 0.0
      %494 = vmatpush1.msra.mxu0 0.0
      %495 = vmatprep.subr.mxu0 0.0
      %496 = vmatpush1.msra.mxu0 0.0
      %497 = vmatprep.subr.mxu0 0.0
      %498 = vmatpush1.msra.mxu0 0.0
      %499 = vmatprep.subr.mxu0 0.0
      %500 = vmatpush1.msra.mxu0 0.0
      %501 = vmatprep.subr.mxu0 0.0
      %502 = vmatpush1.msra.mxu0 0.0
      %503 = vmatprep.subr.mxu0 0.0
      %504 = vmatpush1.msra.mxu0 0.0
      %505 = vmatprep.subr.mxu0 0.0
      %506 = vmatpush1.msra.mxu0 0.0
      %507 = vmatprep.subr.mxu0 0.0
      %508 = vmatpush1.msra.mxu0 0.0
      %509 = vmatprep.subr.mxu0 0.0
      %510 = vmatpush1.msra.mxu0 0.0
      %511 = vmatprep.subr.mxu0 0.0
      %512 = vmatpush1.msra.mxu0 0.0
      %513 = vmatprep.subr.mxu0 0.0
      %514 = vmatpush1.msra.mxu0 0.0
      %515 = vmatprep.subr.mxu0 0.0
      %516 = vmatpush1.msra.mxu0 0.0
      %517 = vmatprep.subr.mxu0 0.0
      %518 = vmatpush1.msra.mxu0 0.0
      %519 = vmatprep.subr.mxu0 0.0
      %520 = vmatpush1.msra.mxu0 0.0
      %521 = vmatprep.subr.mxu0 0.0
      %522 = vmatpush1.msra.mxu0 0.0
      %523 = vmatprep.subr.mxu0 0.0
      %524 = vmatpush1.msra.mxu0 0.0
      %525 = vmatprep.subr.mxu0 0.0
      %526 = vmatpush1.msra.mxu0 0.0
      %527 = vmatprep.subr.mxu0 0.0
      %528 = vmatpush1.msra.mxu0 0.0
      %529 = vmatprep.subr.mxu0 0.0
      %530 = vmatpush1.msra.mxu0 0.0
      %531 = vmatprep.subr.mxu0 0.0
      %532 = vmatpush1.msra.mxu0 0.0
      %533 = vmatprep.subr.mxu0 0.0
      %534 = vmatpush1.msra.mxu0 0.0
      %535 = vmatprep.subr.mxu0 0.0
      %536 = vmatpush1.msra.mxu0 0.0
      %537 = vmatprep.subr.mxu0 0.0
      %538 = vmatpush1.msra.mxu0 0.0
      %539 = vmatprep.subr.mxu0 0.0
      %540 = vmatpush1.msra.mxu0 0.0
      %541 = vmatprep.subr.mxu0 0.0
      %542 = vmatpush1.msra.mxu0 0.0
      %543 = vmatprep.mubr.f32.mxu0 0.0
      %544 = vmatmul.mubr.f32.gmra.mrb[0].mxu0 %v467
      %v545 = vpop.f32.mrb[0].mxu0
      %v546 = vadd.f32 %v458, %v545
      %v547 = vpop.f32.mrb[0].mxu0
      %v548 = vadd.f32 %v458, %v547
      %549 = vmatprep.mubr.f32.mxu0 0.0
      %550 = vmatmul.mubr.f32.gmra.mrb[0].mxu0 %v470
      %v551 = vpop.f32.mrb[0].mxu0
      %v552 = vadd.f32 %v463, %v551
      %v553 = vpop.f32.mrb[0].mxu0
      %v554 = vadd.f32 %v463, %v553
      %555 = vdwg.mxu0
      %v556 = vmax.f32 %v546, 0.0
      %v557 = vmax.f32 %v548, 0.0
      %v558 = vmax.f32 %v552, 0.0
      %v559 = vmax.f32 %v554, 0.0
      %v560 = vld [vmem:[%s4] sm:$0x7]
      %v561 = vld [vmem:[%s5] sm:$0x7]
      %563 = vset.pattern.permute.xlu0 0
      %564 = vperm.xlu0 %563, %v561
      %v565 = vpop.permute.xlu0 %564
      %vm567 = vcmask 130048
      %v569 = vsel %vm567, %v560, 0
      %571 = vmatprep.subr.mxu0 %v557
      %572 = vmatpush1.msra.mxu0 %v556
      %573 = vmatprep.subr.mxu0 %v559
      %574 = vmatpush1.msra.mxu0 %v558
      %575 = vmatprep.subr.mxu0 0.0
      %576 = vmatpush1.msra.mxu0 0.0
      %577 = vmatprep.subr.mxu0 0.0
      %578 = vmatpush1.msra.mxu0 0.0
      %579 = vmatprep.subr.mxu0 0.0
      %580 = vmatpush1.msra.mxu0 0.0
      %581 = vmatprep.subr.mxu0 0.0
      %582 = vmatpush1.msra.mxu0 0.0
      %583 = vmatprep.subr.mxu0 0.0
      %584 = vmatpush1.msra.mxu0 0.0
      %585 = vmatprep.subr.mxu0 0.0
      %586 = vmatpush1.msra.mxu0 0.0
      %587 = vmatprep.subr.mxu0 0.0
      %588 = vmatpush1.msra.mxu0 0.0
      %589 = vmatprep.subr.mxu0 0.0
      %590 = vmatpush1.msra.mxu0 0.0
      %591 = vmatprep.subr.mxu0 0.0
      %592 = vmatpush1.msra.mxu0 0.0
      %593 = vmatprep.subr.mxu0 0.0
      %594 = vmatpush1.msra.mxu0 0.0
      %595 = vmatprep.subr.mxu0 0.0
      %596 = vmatpush1.msra.mxu0 0.0
      %597 = vmatprep.subr.mxu0 0.0
      %598 = vmatpush1.msra.mxu0 0.0
      %599 = vmatprep.subr.mxu0 0.0
      %600 = vmatpush1.msra.mxu0 0.0
      %601 = vmatprep.subr.mxu0 0.0
      %602 = vmatpush1.msra.mxu0 0.0
      %603 = vmatprep.subr.mxu0 0.0
      %604 = vmatpush1.msra.mxu0 0.0
      %605 = vmatprep.subr.mxu0 0.0
      %606 = vmatpush1.msra.mxu0 0.0
      %607 = vmatprep.subr.mxu0 0.0
      %608 = vmatpush1.msra.mxu0 0.0
      %609 = vmatprep.subr.mxu0 0.0
      %610 = vmatpush1.msra.mxu0 0.0
      %611 = vmatprep.subr.mxu0 0.0
      %612 = vmatpush1.msra.mxu0 0.0
      %613 = vmatprep.subr.mxu0 0.0
      %614 = vmatpush1.msra.mxu0 0.0
      %615 = vmatprep.subr.mxu0 0.0
      %616 = vmatpush1.msra.mxu0 0.0
      %617 = vmatprep.subr.mxu0 0.0
      %618 = vmatpush1.msra.mxu0 0.0
      %619 = vmatprep.subr.mxu0 0.0
      %620 = vmatpush1.msra.mxu0 0.0
      %621 = vmatprep.subr.mxu0 0.0
      %622 = vmatpush1.msra.mxu0 0.0
      %623 = vmatprep.subr.mxu0 0.0
      %624 = vmatpush1.msra.mxu0 0.0
      %625 = vmatprep.subr.mxu0 0.0
      %626 = vmatpush1.msra.mxu0 0.0
      %627 = vmatprep.subr.mxu0 0.0
      %628 = vmatpush1.msra.mxu0 0.0
      %629 = vmatprep.subr.mxu0 0.0
      %630 = vmatpush1.msra.mxu0 0.0
      %631 = vmatprep.subr.mxu0 0.0
      %632 = vmatpush1.msra.mxu0 0.0
      %633 = vmatprep.subr.mxu0 0.0
      %634 = vmatpush1.msra.mxu0 0.0
      %635 = vmatprep.mubr.f32.mxu0 0.0
      %636 = vmatmul.mubr.f32.gmra.mrb[0].mxu0 %v569
      %v637 = vpop.f32.mrb[0].mxu0
      %v638 = vadd.f32 %v565, %v637
      %v639 = vpop.f32.mrb[0].mxu0
      %v640 = vadd.f32 %v565, %v639
      %641 = vdwg.mxu0
      %v644 = vrot.slane %v638, 1
      %v645 = vrot.slane %v640, 1
      %vm648 = vcmp.ge.f32.partialorder %v638, %v644
      %vm649 = vcmp.ge.f32.partialorder %v640, %v645
      %v650 = vrot.slane %v638, 2
      %v651 = vrot.slane %v640, 2
      %vm654 = vcmp.ge.f32.partialorder %v638, %v650
      %vm655 = vcmp.ge.f32.partialorder %v640, %v651
      %vm656 = vmand %vm648, %vm654
      %vm657 = vmand %vm649, %vm655
      %vm658 = vmxor %vm656, 1
      %vm659 = vmxor %vm657, 1
      %v660 = vsel %vm648, 1, 0
      %v661 = vsel %vm649, 1, 0
      %v662 = vrot.slane %v660, 1
      %v663 = vrot.slane %v661, 1
      %vm664 = vcmp.ne.s32.totalorder %v662, 0
      %vm665 = vcmp.ne.s32.totalorder %v663, 0
      %vm666 = vmand %vm658, %vm664
      %vm667 = vmand %vm659, %vm665
      %vm668 = vmxor %vm666, 1
      %vm669 = vmxor %vm667, 1
      %vm670 = vmand %vm658, %vm668
      %vm671 = vmand %vm659, %vm669
      %v672 = vadd.f32 %v556, %v558
      %v673 = vrot.slane %v672, 4
      %v674 = vadd.f32 %v672, %v673
      %v675 = vrot.slane %v674, 2
      %v676 = vadd.f32 %v674, %v675
      %v677 = vrot.slane %v676, 1
      %v678 = vadd.f32 %v676, %v677
      %v679 = vadd.f32 %v557, %v559
      %v680 = vrot.slane %v679, 4
      %v681 = vadd.f32 %v679, %v680
      %v682 = vrot.slane %v681, 2
      %v683 = vadd.f32 %v681, %v682
      %v684 = vrot.slane %v683, 1
      %v685 = vadd.f32 %v683, %v684
      %v686 = vrcp.pop 16.0
      %v687 = vmul.f32 %v678, %v686
      %v688 = vmul.f32 %v685, %v686
      %v689 = vmul.f32 %v439, %v687
      %v690 = vmul.f32 %v440, %v688
      %v691 = vmul.f32 %v441, %v687
      %v692 = vmul.f32 %v442, %v688
      %v693 = vmul.f32 %v443, %v687
      %v694 = vmul.f32 %v444, %v688
      %v695 = vmul.f32 %v445, %v687
      %v696 = vmul.f32 %v446, %v688
      %v697 = vsel %vm656, 1, 0
      %v698 = vsel %vm657, 1, 0
      %v699 = vlaneseq
      %v700 = vshrl.u32 %v699, 7
      %v701 = vsub.s32 0, %v700
      %v702 = vrot.slane %v697, %v701
      %v703 = vlaneseq
      %v704 = vshrl.u32 %v703, 7
      %v705 = vsub.s32 0, %v704
      %v706 = vrot.slane %v698, %v705
      %vm707 = vcmp.eq.s32.totalorder %v702, 1
      %vm708 = vcmp.eq.s32.totalorder %v706, 1
      %v709 = vsel %vm707, %v689, 0.0
      %v710 = vsel %vm708, %v690, 0.0
      %v711 = vsel %vm707, %v691, 0.0
      %v712 = vsel %vm708, %v692, 0.0
      %v713 = vsel %vm707, %v693, 0.0
      %v714 = vsel %vm708, %v694, 0.0
      %v715 = vsel %vm707, %v695, 0.0
      %v716 = vsel %vm708, %v696, 0.0
      %v717 = vsel %vm666, 1, 0
      %v718 = vsel %vm667, 1, 0
      %v719 = vlaneseq
      %v720 = vshrl.u32 %v719, 7
      %v721 = vsub.s32 0, %v720
      %v722 = vrot.slane %v717, %v721
      %v723 = vlaneseq
      %v724 = vshrl.u32 %v723, 7
      %v725 = vsub.s32 0, %v724
      %v726 = vrot.slane %v718, %v725
      %vm727 = vcmp.eq.s32.totalorder %v722, 1
      %vm728 = vcmp.eq.s32.totalorder %v726, 1
      %v729 = vsel %vm727, %v689, 0.0
      %v730 = vsel %vm728, %v690, 0.0
      %v731 = vsel %vm727, %v691, 0.0
      %v732 = vsel %vm728, %v692, 0.0
      %v733 = vsel %vm727, %v693, 0.0
      %v734 = vsel %vm728, %v694, 0.0
      %v735 = vsel %vm727, %v695, 0.0
      %v736 = vsel %vm728, %v696, 0.0
      %v737 = vsel %vm670, 1, 0
      %v738 = vsel %vm671, 1, 0
      %v739 = vlaneseq
      %v740 = vshrl.u32 %v739, 7
      %v741 = vsub.s32 0, %v740
      %v742 = vrot.slane %v737, %v741
      %v743 = vlaneseq
      %v744 = vshrl.u32 %v743, 7
      %v745 = vsub.s32 0, %v744
      %v746 = vrot.slane %v738, %v745
      %vm747 = vcmp.eq.s32.totalorder %v742, 1
      %vm748 = vcmp.eq.s32.totalorder %v746, 1
      %v749 = vsel %vm747, %v689, 0.0
      %v750 = vsel %vm748, %v690, 0.0
      %v751 = vsel %vm747, %v691, 0.0
      %v752 = vsel %vm748, %v692, 0.0
      %v753 = vsel %vm747, %v693, 0.0
      %v754 = vsel %vm748, %v694, 0.0
      %v755 = vsel %vm747, %v695, 0.0
      %v756 = vsel %vm748, %v696, 0.0
      %v757 = vpack.c.bf16 %v711, %v709
      %v758 = vpack.c.bf16 %v712, %v710
      %v759 = vpack.c.bf16 %v715, %v713
      %v760 = vpack.c.bf16 %v716, %v714
      %v761 = vpack.c.bf16 %v731, %v729
      %v762 = vpack.c.bf16 %v732, %v730
      %v763 = vpack.c.bf16 %v735, %v733
      %v764 = vpack.c.bf16 %v736, %v734
      %v765 = vpack.c.bf16 %v751, %v749
      %v766 = vpack.c.bf16 %v752, %v750
      %v767 = vpack.c.bf16 %v755, %v753
      %v768 = vpack.c.bf16 %v756, %v754
      %v769 = vld [vmem:[%s6] sm:$0xf]
      %v770 = vld [vmem:[%s6 + $0x4] sm:$0xf]
      %v771 = vld [vmem:[%s6 + $0x8] sm:$0xf]
      %v772 = vld [vmem:[%s6 + $0xc] sm:$0xf]
      %v773 = vld [vmem:[%s7] sm:$0xff]
      %v774 = vld [vmem:[%s7 + $0x8] sm:$0xff]
      %v775 = vld [vmem:[%s7 + $0x10] sm:$0xff]
      %v776 = vld [vmem:[%s7 + $0x18] sm:$0xff]
      %778 = vset.pattern.permute.xlu0 0
      %779 = vperm.xlu0 %778, %v773
      %v780 = vpop.permute.xlu0 %779
      %783 = vset.pattern.permute.xlu0 0
      %784 = vperm.xlu0 %783, %v774
      %v785 = vpop.permute.xlu0 %784
      %788 = vset.pattern.permute.xlu0 0
      %789 = vperm.xlu0 %788, %v775
      %v790 = vpop.permute.xlu0 %789
      %793 = vset.pattern.permute.xlu0 0
      %794 = vperm.xlu0 %793, %v776
      %v795 = vpop.permute.xlu0 %794
      %v801 = vunpack.c.l.b16 %v769
      %v802 = vunpack.c.l.b16 %v770
      %v803 = vunpack.c.l.b16 %v771
      %v804 = vunpack.c.l.b16 %v772
      %v805 = vpack.c.b16 %v802, %v801
      %v806 = vpack.c.b16 %v804, %v803
      %vm807 = vcmask 785408
      %v809 = vsel %vm807, %v805, 0
      %v812 = vsel %vm807, %v806, 0
      %814 = vmatprep.subr.bf16.mxu0 %v758
      %815 = vmatpush1.bf16.msra.mxu0 %v757
      %816 = vmatprep.subr.bf16.mxu0 %v760
      %817 = vmatpush1.bf16.msra.mxu0 %v759
      %818 = vmatprep.subr.bf16.mxu0 %v762
      %819 = vmatpush1.bf16.msra.mxu0 %v761
      %820 = vmatprep.subr.bf16.mxu0 %v764
      %821 = vmatpush1.bf16.msra.mxu0 %v763
      %822 = vmatprep.subr.bf16.mxu0 %v766
      %823 = vmatpush1.bf16.msra.mxu0 %v765
      %824 = vmatprep.subr.bf16.mxu0 %v768
      %825 = vmatpush1.bf16.msra.mxu0 %v767
      %826 = vmatprep.subr.bf16.mxu0 0
      %827 = vmatpush1.bf16.msra.mxu0 0
      %828 = vmatprep.subr.bf16.mxu0 0
      %829 = vmatpush1.bf16.msra.mxu0 0
      %830 = vmatprep.subr.bf16.mxu0 0
      %831 = vmatpush1.bf16.msra.mxu0 0
      %832 = vmatprep.subr.bf16.mxu0 0
      %833 = vmatpush1.bf16.msra.mxu0 0
      %834 = vmatprep.subr.bf16.mxu0 0
      %835 = vmatpush1.bf16.msra.mxu0 0
      %836 = vmatprep.subr.bf16.mxu0 0
      %837 = vmatpush1.bf16.msra.mxu0 0
      %838 = vmatprep.subr.bf16.mxu0 0
      %839 = vmatpush1.bf16.msra.mxu0 0
      %840 = vmatprep.subr.bf16.mxu0 0
      %841 = vmatpush1.bf16.msra.mxu0 0
      %842 = vmatprep.subr.bf16.mxu0 0
      %843 = vmatpush1.bf16.msra.mxu0 0
      %844 = vmatprep.subr.bf16.mxu0 0
      %845 = vmatpush1.bf16.msra.mxu0 0
      %846 = vmatprep.mubr.bf16.mxu0 0
      %847 = vmatmul.mubr.bf16.gmra.mrb[0].mxu0 %v809
      %v848 = vpop.f32.mrb[0].mxu0
      %v849 = vadd.f32 %v780, %v848
      %v850 = vpop.f32.mrb[0].mxu0
      %v851 = vadd.f32 %v780, %v850
      %v852 = vpop.f32.mrb[0].mxu0
      %v853 = vadd.f32 %v785, %v852
      %v854 = vpop.f32.mrb[0].mxu0
      %v855 = vadd.f32 %v785, %v854
      %856 = vmatprep.mubr.bf16.mxu0 0
      %857 = vmatmul.mubr.bf16.gmra.mrb[0].mxu0 %v812
      %v858 = vpop.f32.mrb[0].mxu0
      %v859 = vadd.f32 %v790, %v858
      %v860 = vpop.f32.mrb[0].mxu0
      %v861 = vadd.f32 %v790, %v860
      %v862 = vpop.f32.mrb[0].mxu0
      %v863 = vadd.f32 %v795, %v862
      %v864 = vpop.f32.mrb[0].mxu0
      %v865 = vadd.f32 %v795, %v864
      %866 = vdwg.mxu0
      %v867 = vadd.f32 %v849, %v439
      %v868 = vadd.f32 %v851, %v440
      %v869 = vadd.f32 %v853, %v441
      %v870 = vadd.f32 %v855, %v442
      %v871 = vadd.f32 %v859, %v443
      %v872 = vadd.f32 %v861, %v444
      %v873 = vadd.f32 %v863, %v445
      %v874 = vadd.f32 %v865, %v446
      %v875 = vadd.f32 %v867, %v868
      %876 = vadd.xlane.f32.xlu0 %v875
      %v877 = vpop.xlane.xlu0 %876
      %v878 = vadd.f32 %v869, %v870
      %879 = vadd.xlane.f32.xlu0 %v878
      %v880 = vpop.xlane.xlu0 %879
      %v881 = vadd.f32 %v871, %v872
      %882 = vadd.xlane.f32.xlu0 %v881
      %v883 = vpop.xlane.xlu0 %882
      %v884 = vadd.f32 %v873, %v874
      %885 = vadd.xlane.f32.xlu0 %v884
      %v886 = vpop.xlane.xlu0 %885
      %v887 = vrcp.pop 256.0
      %v888 = vmul.f32 %v877, %v887
      %v889 = vmul.f32 %v880, %v887
      %v890 = vmul.f32 %v883, %v887
      %v891 = vmul.f32 %v886, %v887
      %v892 = vld [vmem:[%s8] sm:$0x3]
      %vm893 = vcmask 261120
      %v895 = vsel %vm893, %v892, 0
      %897 = vmatprep.subr.mxu0 0.0
      %898 = vmatpush1.msra.mxu0 %v888
      %899 = vmatprep.subr.mxu0 0.0
      %900 = vmatpush1.msra.mxu0 %v889
      %901 = vmatprep.subr.mxu0 0.0
      %902 = vmatpush1.msra.mxu0 %v890
      %903 = vmatprep.subr.mxu0 0.0
      %904 = vmatpush1.msra.mxu0 %v891
      %905 = vmatprep.subr.mxu0 0.0
      %906 = vmatpush1.msra.mxu0 0.0
      %907 = vmatprep.subr.mxu0 0.0
      %908 = vmatpush1.msra.mxu0 0.0
      %909 = vmatprep.subr.mxu0 0.0
      %910 = vmatpush1.msra.mxu0 0.0
      %911 = vmatprep.subr.mxu0 0.0
      %912 = vmatpush1.msra.mxu0 0.0
      %913 = vmatprep.subr.mxu0 0.0
      %914 = vmatpush1.msra.mxu0 0.0
      %915 = vmatprep.subr.mxu0 0.0
      %916 = vmatpush1.msra.mxu0 0.0
      %917 = vmatprep.subr.mxu0 0.0
      %918 = vmatpush1.msra.mxu0 0.0
      %919 = vmatprep.subr.mxu0 0.0
      %920 = vmatpush1.msra.mxu0 0.0
      %921 = vmatprep.subr.mxu0 0.0
      %922 = vmatpush1.msra.mxu0 0.0
      %923 = vmatprep.subr.mxu0 0.0
      %924 = vmatpush1.msra.mxu0 0.0
      %925 = vmatprep.subr.mxu0 0.0
      %926 = vmatpush1.msra.mxu0 0.0
      %927 = vmatprep.subr.mxu0 0.0
      %928 = vmatpush1.msra.mxu0 0.0
      %929 = vmatprep.subr.mxu0 0.0
      %930 = vmatpush1.msra.mxu0 0.0
      %931 = vmatprep.subr.mxu0 0.0
      %932 = vmatpush1.msra.mxu0 0.0
      %933 = vmatprep.subr.mxu0 0.0
      %934 = vmatpush1.msra.mxu0 0.0
      %935 = vmatprep.subr.mxu0 0.0
      %936 = vmatpush1.msra.mxu0 0.0
      %937 = vmatprep.subr.mxu0 0.0
      %938 = vmatpush1.msra.mxu0 0.0
      %939 = vmatprep.subr.mxu0 0.0
      %940 = vmatpush1.msra.mxu0 0.0
      %941 = vmatprep.subr.mxu0 0.0
      %942 = vmatpush1.msra.mxu0 0.0
      %943 = vmatprep.subr.mxu0 0.0
      %944 = vmatpush1.msra.mxu0 0.0
      %945 = vmatprep.subr.mxu0 0.0
      %946 = vmatpush1.msra.mxu0 0.0
      %947 = vmatprep.subr.mxu0 0.0
      %948 = vmatpush1.msra.mxu0 0.0
      %949 = vmatprep.subr.mxu0 0.0
      %950 = vmatpush1.msra.mxu0 0.0
      %951 = vmatprep.subr.mxu0 0.0
      %952 = vmatpush1.msra.mxu0 0.0
      %953 = vmatprep.subr.mxu0 0.0
      %954 = vmatpush1.msra.mxu0 0.0
      %955 = vmatprep.subr.mxu0 0.0
      %956 = vmatpush1.msra.mxu0 0.0
      %957 = vmatprep.subr.mxu0 0.0
      %958 = vmatpush1.msra.mxu0 0.0
      %959 = vmatprep.subr.mxu0 0.0
      %960 = vmatpush1.msra.mxu0 0.0
      %961 = vmatprep.mubr.f32.mxu0 0.0
      %962 = vmatmul.mubr.f32.gmra.mrb[0].mxu0 %v895
      %v963 = vpop.f32.mrb[0].mxu0
      %v964 = vadd.f32 0.0, %v963
      %v965 = vpop.f32.mrb[0].mxu0
      %966 = vdwg.mxu0
      %v967 = vmax.f32 %v964, 0.0
      %v968 = vld [vmem:[%s9] sm:$0xff]
      %v969 = vld [vmem:[%s9 + $0x8] sm:$0xff]
      %v970 = vld [vmem:[%s9 + $0x10] sm:$0xff]
      %v971 = vld [vmem:[%s9 + $0x18] sm:$0xff]
      %vm972 = vcmask 15360
      %v974 = vsel %vm972, %v968, 0
      %v977 = vsel %vm972, %v969, 0
      %v980 = vsel %vm972, %v970, 0
      %v983 = vsel %vm972, %v971, 0
      %vm985 = vcmask 1041408
      %v987 = vsel %vm985, %v967, 0
      %989 = vmatprep.subr.mxu0 0.0
      %990 = vmatpush1.msra.mxu0 %v987
      %991 = vmatprep.subr.mxu0 0.0
      %992 = vmatpush1.msra.mxu0 0.0
      %993 = vmatprep.subr.mxu0 0.0
      %994 = vmatpush1.msra.mxu0 0.0
      %995 = vmatprep.subr.mxu0 0.0
      %996 = vmatpush1.msra.mxu0 0.0
      %997 = vmatprep.subr.mxu0 0.0
      %998 = vmatpush1.msra.mxu0 0.0
      %999 = vmatprep.subr.mxu0 0.0
      %1000 = vmatpush1.msra.mxu0 0.0
      %1001 = vmatprep.subr.mxu0 0.0
      %1002 = vmatpush1.msra.mxu0 0.0
      %1003 = vmatprep.subr.mxu0 0.0
      %1004 = vmatpush1.msra.mxu0 0.0
      %1005 = vmatprep.subr.mxu0 0.0
      %1006 = vmatpush1.msra.mxu0 0.0
      %1007 = vmatprep.subr.mxu0 0.0
      %1008 = vmatpush1.msra.mxu0 0.0
      %1009 = vmatprep.subr.mxu0 0.0
      %1010 = vmatpush1.msra.mxu0 0.0
      %1011 = vmatprep.subr.mxu0 0.0
      %1012 = vmatpush1.msra.mxu0 0.0
      %1013 = vmatprep.subr.mxu0 0.0
      %1014 = vmatpush1.msra.mxu0 0.0
      %1015 = vmatprep.subr.mxu0 0.0
      %1016 = vmatpush1.msra.mxu0 0.0
      %1017 = vmatprep.subr.mxu0 0.0
      %1018 = vmatpush1.msra.mxu0 0.0
      %1019 = vmatprep.subr.mxu0 0.0
      %1020 = vmatpush1.msra.mxu0 0.0
      %1021 = vmatprep.subr.mxu0 0.0
      %1022 = vmatpush1.msra.mxu0 0.0
      %1023 = vmatprep.subr.mxu0 0.0
      %1024 = vmatpush1.msra.mxu0 0.0
      %1025 = vmatprep.subr.mxu0 0.0
      %1026 = vmatpush1.msra.mxu0 0.0
      %1027 = vmatprep.subr.mxu0 0.0
      %1028 = vmatpush1.msra.mxu0 0.0
      %1029 = vmatprep.subr.mxu0 0.0
      %1030 = vmatpush1.msra.mxu0 0.0
      %1031 = vmatprep.subr.mxu0 0.0
      %1032 = vmatpush1.msra.mxu0 0.0
      %1033 = vmatprep.subr.mxu0 0.0
      %1034 = vmatpush1.msra.mxu0 0.0
      %1035 = vmatprep.subr.mxu0 0.0
      %1036 = vmatpush1.msra.mxu0 0.0
      %1037 = vmatprep.subr.mxu0 0.0
      %1038 = vmatpush1.msra.mxu0 0.0
      %1039 = vmatprep.subr.mxu0 0.0
      %1040 = vmatpush1.msra.mxu0 0.0
      %1041 = vmatprep.subr.mxu0 0.0
      %1042 = vmatpush1.msra.mxu0 0.0
      %1043 = vmatprep.subr.mxu0 0.0
      %1044 = vmatpush1.msra.mxu0 0.0
      %1045 = vmatprep.subr.mxu0 0.0
      %1046 = vmatpush1.msra.mxu0 0.0
      %1047 = vmatprep.subr.mxu0 0.0
      %1048 = vmatpush1.msra.mxu0 0.0
      %1049 = vmatprep.subr.mxu0 0.0
      %1050 = vmatpush1.msra.mxu0 0.0
      %1051 = vmatprep.subr.mxu0 0.0
      %1052 = vmatpush1.msra.mxu0 0.0
      %1053 = vmatprep.mubr.f32.mxu0 0.0
      %1054 = vmatmul.mubr.f32.gmra.mrb[0].mxu0 %v974
      %v1055 = vpop.f32.mrb[0].mxu0
      %v1056 = vadd.f32 0.0, %v1055
      %v1057 = vpop.f32.mrb[0].mxu0
      %1058 = vmatprep.mubr.f32.mxu0 0.0
      %1059 = vmatmul.mubr.f32.gmra.mrb[0].mxu0 %v977
      %v1060 = vpop.f32.mrb[0].mxu0
      %v1061 = vadd.f32 0.0, %v1060
      %v1062 = vpop.f32.mrb[0].mxu0
      %1063 = vmatprep.mubr.f32.mxu0 0.0
      %1064 = vmatmul.mubr.f32.gmra.mrb[0].mxu0 %v980
      %v1065 = vpop.f32.mrb[0].mxu0
      %v1066 = vadd.f32 0.0, %v1065
      %v1067 = vpop.f32.mrb[0].mxu0
      %1068 = vmatprep.mubr.f32.mxu0 0.0
      %1069 = vmatmul.mubr.f32.gmra.mrb[0].mxu0 %v983
      %v1070 = vpop.f32.mrb[0].mxu0
      %v1071 = vadd.f32 0.0, %v1070
      %v1072 = vpop.f32.mrb[0].mxu0
      %1073 = vdwg.mxu0
      %v1074 = vxor.u32 %v1056, 2147483648
      %v1075 = vxor.u32 %v1061, 2147483648
      %v1076 = vxor.u32 %v1066, 2147483648
      %v1077 = vxor.u32 %v1071, 2147483648
      %v1078 = vmul.f32 %v1074, 1.442695
      %v1079 = vpow.pop %v1078
      %v1080 = vmul.f32 %v1075, 1.442695
      %v1081 = vpow.pop %v1080
      %v1082 = vmul.f32 %v1076, 1.442695
      %v1083 = vpow.pop %v1082
      %v1084 = vmul.f32 %v1077, 1.442695
      %v1085 = vpow.pop %v1084
      %v1086 = vadd.f32 %v1079, 1.0
      %v1087 = vadd.f32 %v1081, 1.0
      %v1088 = vadd.f32 %v1083, 1.0
      %v1089 = vadd.f32 %v1085, 1.0
      %v1090 = vrcp.pop %v1086
      %v1091 = vmul.f32 1.0, %v1090
      %v1092 = vrcp.pop %v1087
      %v1093 = vmul.f32 1.0, %v1092
      %v1094 = vrcp.pop %v1088
      %v1095 = vmul.f32 1.0, %v1094
      %v1096 = vrcp.pop %v1089
      %v1097 = vmul.f32 1.0, %v1096
      %1099 = vset.pattern.permute.xlu0 0
      %1100 = vperm.xlu0 %1099, %v1091
      %v1101 = vpop.permute.xlu0 %1100
      %1104 = vset.pattern.permute.xlu0 0
      %1105 = vperm.xlu0 %1104, %v1093
      %v1106 = vpop.permute.xlu0 %1105
      %1109 = vset.pattern.permute.xlu0 0
      %1110 = vperm.xlu0 %1109, %v1095
      %v1111 = vpop.permute.xlu0 %1110
      %1114 = vset.pattern.permute.xlu0 0
      %1115 = vperm.xlu0 %1114, %v1097
      %v1116 = vpop.permute.xlu0 %1115
      %v1118 = vmul.f32 %v867, %v1101
      %v1119 = vmul.f32 %v868, %v1101
      %v1120 = vmul.f32 %v869, %v1106
      %v1121 = vmul.f32 %v870, %v1106
      %v1122 = vmul.f32 %v871, %v1111
      %v1123 = vmul.f32 %v872, %v1111
      %v1124 = vmul.f32 %v873, %v1116
      %v1125 = vmul.f32 %v874, %v1116
      %v1126 = vld [vmem:[%s10] sm:$0x3]
      %v1127 = vpack.c.bf16 %v1120, %v1118
      %v1128 = vpack.c.bf16 %v1121, %v1119
      %v1129 = vpack.c.bf16 %v1124, %v1122
      %v1130 = vpack.c.bf16 %v1125, %v1123
      %v1131 = vld [vmem:[%s11] sm:$0xf]
      %1133 = vset.pattern.permute.xlu0 0
      %1134 = vperm.xlu0 %1133, %v1131
      %v1135 = vpop.permute.xlu0 %1134
      %v1138 = vsel %vm893, %v1126, 0
      %1140 = vmatprep.subr.bf16.mxu0 %v1128
      %1141 = vmatpush1.bf16.msra.mxu0 %v1127
      %1142 = vmatprep.subr.bf16.mxu0 %v1130
      %1143 = vmatpush1.bf16.msra.mxu0 %v1129
      %1144 = vmatprep.subr.bf16.mxu0 0
      %1145 = vmatpush1.bf16.msra.mxu0 0
      %1146 = vmatprep.subr.bf16.mxu0 0
      %1147 = vmatpush1.bf16.msra.mxu0 0
      %1148 = vmatprep.subr.bf16.mxu0 0
      %1149 = vmatpush1.bf16.msra.mxu0 0
      %1150 = vmatprep.subr.bf16.mxu0 0
      %1151 = vmatpush1.bf16.msra.mxu0 0
      %1152 = vmatprep.subr.bf16.mxu0 0
      %1153 = vmatpush1.bf16.msra.mxu0 0
      %1154 = vmatprep.subr.bf16.mxu0 0
      %1155 = vmatpush1.bf16.msra.mxu0 0
      %1156 = vmatprep.subr.bf16.mxu0 0
      %1157 = vmatpush1.bf16.msra.mxu0 0
      %1158 = vmatprep.subr.bf16.mxu0 0
      %1159 = vmatpush1.bf16.msra.mxu0 0
      %1160 = vmatprep.subr.bf16.mxu0 0
      %1161 = vmatpush1.bf16.msra.mxu0 0
      %1162 = vmatprep.subr.bf16.mxu0 0
      %1163 = vmatpush1.bf16.msra.mxu0 0
      %1164 = vmatprep.subr.bf16.mxu0 0
      %1165 = vmatpush1.bf16.msra.mxu0 0
      %1166 = vmatprep.subr.bf16.mxu0 0
      %1167 = vmatpush1.bf16.msra.mxu0 0
      %1168 = vmatprep.subr.bf16.mxu0 0
      %1169 = vmatpush1.bf16.msra.mxu0 0
      %1170 = vmatprep.subr.bf16.mxu0 0
      %1171 = vmatpush1.bf16.msra.mxu0 0
      %1172 = vmatprep.mubr.bf16.mxu0 0
      %1173 = vmatmul.mubr.bf16.gmra.mrb[0].mxu0 %v1138
      %v1174 = vpop.f32.mrb[0].mxu0
      %v1175 = vadd.f32 %v1135, %v1174
      %v1176 = vpop.f32.mrb[0].mxu0
      %v1177 = vadd.f32 %v1135, %v1176
      %v1178 = vpop.f32.mrb[0].mxu0
      %v1179 = vpop.f32.mrb[0].mxu0
      %1180 = vdwg.mxu0
      %v1183 = vcombine.low %v1175, %v1177
      %1185 = vst [vmem:[%s433] sm:$0xff] %v1183
      %p1186 = scmp.lt.s32.totalorder %s23, 1
      %s1187 = scalar_select %p1186, %s23, 1
      %s1188 = smul.addr %s1187, 2
      %s1189 = smul.addr %s1188, 4
      %s1190 = scalar_lea.vmem %s12, %s1189
      // Predicated region
      $region69: #{adaptive_dsam_forward.1} parent=67 // pred_check
        %p1191 = pneg %p303
      $region70: #{adaptive_dsam_forward.1} parent=67 // pred_check_branch
        %1193 = sbr.rel (%p1191) target = $region72
      $region71: #{adaptive_dsam_forward.1} parent=67 // pred_region
        _
      $region72: #{adaptive_dsam_forward.1} parent=67 // pred_fallthru
        _
    $region68: #{adaptive_dsam_forward.1} parent=5 // pred_fallthru
      _
    %p1194 = scmp.le.s32.totalorder 2, %s18
    // Predicated region
    $region73: #{adaptive_dsam_forward.1} parent=5 // pred_check
      %p1195 = pneg %p1194
    $region74: #{adaptive_dsam_forward.1} parent=5 // pred_check_branch
      %1197 = sbr.rel (%p1195) target = $region76
    $region75: #{adaptive_dsam_forward.1} parent=5 // pred_region
      %s1198 = ssub.s32 %s18, 2
      // Predicated region
      $region77: #{adaptive_dsam_forward.1} parent=75 // pred_check
        %p1199 = pneg %p309
      $region78: #{adaptive_dsam_forward.1} parent=75 // pred_check_branch
        %1201 = sbr.rel (%p1199) target = $region80
      $region79: #{adaptive_dsam_forward.1} parent=75 // pred_region
        %p1202 = scmp.lt.s32.totalorder %s24, 1
        %s1203 = scalar_select %p1202, %s24, 1
        %s1204 = smul.addr %s1203, 2
        %s1205 = smul.addr %s1204, 4
        %s1206 = scalar_lea.vmem %s12, %s1205
      $region80: #{adaptive_dsam_forward.1} parent=75 // pred_fallthru
        _
    $region76: #{adaptive_dsam_forward.1} parent=5 // pred_fallthru
      _
  $region6: #{adaptive_dsam_forward.1} parent=0 // loop_footer
    %s22 = sadd.s32 1, %s18
  $region7: #{adaptive_dsam_forward.1} parent=0 // loop_footer_branch
    %17 = sbr.rel target = $region3
  $region8: #{adaptive_dsam_forward.1} parent=0 // loop_exit
    _

</llo_original>
